<compile_context>
chip_gen: v7x
topology: tpu7x:2x2x1
jax: 0.10.0
libtpu: 0.0.40
codegen_flags: <defaults>
</compile_context>

<pallas_src>
import functools

import numpy as np
import jax
import jax.numpy as jnp
from jax.experimental import pallas as pl
from jax.experimental.pallas import tpu as pltpu

L = 4            # lattice size l (small example)
TAIL = 16        # flattened (4, 2, 2)


# ----------------------------------------------------------------------------
# Static 16x16 permutation matrices for the tail transforms (deterministic setup).
# Convention: out_row_vector = in_row_vector @ M.
# ----------------------------------------------------------------------------
def _T_np(v):                       # v: (4, 2, 2); mirrors permute(0,3,2,1).reshape(.,4,2,2)[:, [0,2,1,3]]
    y = np.transpose(v, (2, 1, 0))  # reverse the three tail dims -> (2, 2, 4)
    z = y.reshape(4, 2, 2)
    return z[[0, 2, 1, 3], :, :]


def _primal_np(v, axis):            # torch.roll(x[mask], shifts=1, dims=-1-axis)
    return np.roll(v, 1, axis=-1 - axis)


def _dual_np(v, axis):              # T(roll(T(candidate), shifts=1, dims=-2+axis))
    t = _T_np(v)
    t = np.roll(t, 1, axis=-2 + axis)
    return _T_np(t)


def _perm_matrix(fn):
    m = np.zeros((TAIL, TAIL), dtype=np.float32)
    for f in range(TAIL):
        e = np.zeros(TAIL, dtype=np.float32)
        e[f] = 1.0
        m[f, :] = fn(e.reshape(4, 2, 2)).reshape(TAIL)
    return m


# Application order (matches the module's sequential in-place updates on a row vector):
#   bit 0: pass-1 (axis=0) primal, bit 1: pass-1 dual, bit 2: pass-2 (axis=1) primal, bit 3: pass-2 dual.
_MATS = np.stack([
    _perm_matrix(lambda v: _primal_np(v, 0)),
    _perm_matrix(lambda v: _dual_np(v, 0)),
    _perm_matrix(lambda v: _primal_np(v, 1)),
    _perm_matrix(lambda v: _dual_np(v, 1)),
]).astype(np.float32)                           # (4, 16, 16), exact 0/1


@functools.lru_cache(maxsize=None)
def _pooling_tables(ll):
    """Host-precomputed constant tables (hoisted out of the per-call path).

    BD[k]  = kron(I_ll, B_k)                 (ll*16, ll*16)  block-diagonal permutations
    POOL   = kron(ones(ll,1)/ll, I_16)       (ll*16, 16)     spatial mean folded in
    P      = kron(I_ll, ones(1,16))          (ll, ll*16)     flag -> 16-lane expansion
    All entries are exact in f32 (0/1 or 1/ll with ll a power of two here).
    """
    eye_ll = np.eye(ll, dtype=np.float32)
    bd = np.stack([np.kron(eye_ll, _MATS[k]) for k in range(4)]).astype(np.float32)
    pool = np.kron(np.ones((ll, 1), np.float32) / float(ll),
                   np.eye(TAIL, dtype=np.float32)).astype(np.float32)
    pmat = np.kron(eye_ll, np.ones((1, TAIL), np.float32)).astype(np.float32)
    return jnp.asarray(bd), jnp.asarray(pool), jnp.asarray(pmat)


# ----------------------------------------------------------------------------
# Syndrome -> condition flags (tiny glue; matches get_logic_action_flag).
# TODO(synk): flag cumsum kept in plain JAX (O(b*L) scalars, not the hot path).
# ----------------------------------------------------------------------------
def _get_logic_action_flag(s, axis, shift, l):
    b = s.shape[0]
    syn = s.reshape(b, l, l).astype(jnp.int32)
    rolled = jnp.roll(syn, shift, axis=2 - axis)
    v = jnp.sum(rolled, axis=1 + axis)
    v = jnp.flip(v, axis=-1)
    v = jnp.roll(v, 1, axis=-1)
    c = jnp.cumsum(v, axis=-1)
    c = jnp.roll(c, 1, axis=-1)
    return (c % 2) > 0              # (b, l) bool


# ----------------------------------------------------------------------------
# Pallas kernel: batch-tiled 4-bit factorized permutation pooling.
# ----------------------------------------------------------------------------
def _pooling_kernel(x_ref, idx_ref, p_ref, bd_ref, pool_ref, o_ref):
    # x_ref:    (BT, LL*16)        f32  lane-dense probabilities, column c = pos*16 + f
    # idx_ref:  (BT, LL)           f32  composite 4-bit flag (0..15) per spatial position
    # p_ref:    (LL, LL*16)        f32  flag -> per-lane expansion matrix (constant)
    # bd_ref:   (4, LL*16, LL*16)  f32  block-diagonal permutations per flag bit (constant)
    # pool_ref: (LL*16, 16)        f32  spatial-mean pooling matrix, 1/LL folded in (constant)
    # o_ref:    (BT, 16)           f32  pooled action tensor
    x = x_ref[...]

    # Expand each position's flag across its 16 tail lanes via MXU (exact small ints),
    # then cast once; per-bit masks are derived just-in-time and consumed immediately.
    idx_e = jnp.dot(idx_ref[...], p_ref[...], preferred_element_type=jnp.float32)
    idx_i = idx_e.astype(jnp.int32)                                   # (BT, LL*16)

    for k in range(4):
        y = jnp.dot(x, bd_ref[k], preferred_element_type=jnp.float32)  # (BT,256)x(256,256) MXU
        x = jnp.where((idx_i & (1 << k)) != 0, y, x)                    # single VPU select per bit

    # Spatial mean (and 1/LL scale) folded into one (BT,256)x(256,16) matmul.
    o_ref[...] = jnp.dot(x, pool_ref[...], preferred_element_type=jnp.float32)


def _round_up(n, m):
    return ((n + m - 1) // m) * m


def translational_equivariant_pooling_2d(x, syndrome, l, *, batch_tile=2048):
    """x: (b, l, l, 4, 2, 2) f32, syndrome: (b, 2*l*l). Returns (b, 4, 2, 2)."""
    b = x.shape[0]
    ll = l * l
    x_flat = x.reshape(b, ll * TAIL).astype(jnp.float32)    # column c = pos*16 + f

    # ---- syndrome -> per-position composite flag (tiny O(b*ll) glue) ----
    half = syndrome.shape[1] // 2
    primal_s, dual_s = syndrome[:, :half], syndrome[:, half:]
    fp1 = _get_logic_action_flag(primal_s, axis=0, shift=1, l=l)
    fd1 = _get_logic_action_flag(dual_s,   axis=0, shift=0, l=l)
    fp2 = _get_logic_action_flag(primal_s, axis=1, shift=1, l=l)
    fd2 = _get_logic_action_flag(dual_s,   axis=1, shift=0, l=l)
    pm1 = jnp.broadcast_to(fp1[:, None, :], (b, l, l)).reshape(b, ll).astype(jnp.int32)
    dm1 = jnp.broadcast_to(fd1[:, None, :], (b, l, l)).reshape(b, ll).astype(jnp.int32)
    pm2 = jnp.broadcast_to(fp2[:, :, None], (b, l, l)).reshape(b, ll).astype(jnp.int32)
    dm2 = jnp.broadcast_to(fd2[:, :, None], (b, l, l)).reshape(b, ll).astype(jnp.int32)
    idx = (pm1 + 2 * dm1 + 4 * pm2 + 8 * dm2).astype(jnp.float32)       # (b, ll), 4 B/pos

    bd, pool, pmat = _pooling_tables(ll)                                 # cached constants

    # ---- batch tiling ----
    # Keep >= ~4 grid steps (when b is large enough) so the "parallel" axis actually
    # shards across v7x's two TensorCores, while still amortizing per-step overhead.
    batch_tile = _round_up(max(int(batch_tile), 8), 8)
    bt = min(batch_tile, max(8, _round_up(-(-b // 4), 8)))
    b_pad = _round_up(b, bt)
    if b_pad != b:
        # Padded rows: x = 0, flag = 0 (identity) -> contribute nothing; sliced off below.
        x_flat = jnp.pad(x_flat, ((0, b_pad - b), (0, 0)))
        idx = jnp.pad(idx, ((0, b_pad - b), (0, 0)))

    out = pl.pallas_call(
        _pooling_kernel,
        out_shape=jax.ShapeDtypeStruct((b_pad, TAIL), jnp.float32),
        grid=(b_pad // bt,),
        in_specs=[
            pl.BlockSpec((bt, ll * TAIL), lambda i: (i, 0)),             # lane-dense x tile
            pl.BlockSpec((bt, ll), lambda i: (i, 0)),                    # compact flag tile
            pl.BlockSpec((ll, ll * TAIL), lambda i: (0, 0)),             # P (constant block)
            pl.BlockSpec((4, ll * TAIL, ll * TAIL), lambda i: (0, 0, 0)),  # BD_k (constant block)
            pl.BlockSpec((ll * TAIL, TAIL), lambda i: (0, 0)),           # pooling matrix (constant)
        ],
        out_specs=pl.BlockSpec((bt, TAIL), lambda i: (i, 0)),
        compiler_params=pltpu.CompilerParams(
            dimension_semantics=("parallel",),
            vmem_limit_bytes=48 * 1024 * 1024,   # ~20 MiB budget at BT=2048 + headroom
        ),
    )(x_flat, idx, pmat, bd, pool)
    return out[:b].reshape(b, 4, 2, 2)


# ----------------------------------------------------------------------------
# Pure-JAX reference (literal transcription of the PyTorch module) for validation.
# ----------------------------------------------------------------------------
def _ref_forward(x, syndrome, l):
    comm = jnp.array([0, 2, 1, 3])

    def T(v):                                  # tail transform on (..., 4, 2, 2)
        y = jnp.swapaxes(v, -1, -3)            # == permute(0, 3, 2, 1)
        z = y.reshape(*v.shape[:-3], 4, 2, 2)
        return jnp.take(z, comm, axis=-3)

    def logic_action_average(x, syndrome, axis):
        b, l_, _, *_ = x.shape
        half = syndrome.shape[1] // 2
        fp = _get_logic_action_flag(syndrome[:, :half], axis=axis, shift=1, l=l)
        fd = _get_logic_action_flag(syndrome[:, half:], axis=axis, shift=0, l=l)
        pmask = jnp.broadcast_to(fp[:, None, :], (b, l_, l_))[..., None, None, None]
        dmask = jnp.broadcast_to(fd[:, None, :], (b, l_, l_))[..., None, None, None]
        x = jnp.where(pmask, jnp.roll(x, 1, axis=-1 - axis), x)
        t = jnp.roll(T(x), 1, axis=-2 + axis)
        x = jnp.where(dmask, T(t), x)
        return x

    for i in range(2):
        x = logic_action_average(x, syndrome, axis=i)
        x = jnp.swapaxes(x, 1, 2)
    return jnp.mean(x, axis=(1, 2))


if __name__ == "__main__":
    key = jax.random.PRNGKey(0)
    kx, ks = jax.random.split(key)

    # Small example shapes consistent with the module.
    b = 2
    x = jax.random.normal(kx, (b, L, L, 4, 2, 2), dtype=jnp.float32)
    syndrome = jax.random.bernoulli(ks, 0.5, (b, 2 * L * L)).astype(jnp.float32)

    out = translational_equivariant_pooling_2d(x, syndrome, L)
    out = jax.block_until_ready(out)
    ref = _ref_forward(x, syndrome, L)
    assert out.shape == (b, 4, 2, 2)
    np.testing.assert_allclose(np.asarray(out), np.asarray(ref), rtol=1e-5, atol=1e-5)

    # Also exercise the multi-step batch-tiled grid and the padding path.
    b2 = 37
    kx2, ks2 = jax.random.split(ks)
    x2 = jax.random.normal(kx2, (b2, L, L, 4, 2, 2), dtype=jnp.float32)
    syn2 = jax.random.bernoulli(ks2, 0.5, (b2, 2 * L * L)).astype(jnp.float32)
    out2 = jax.block_until_ready(
        translational_equivariant_pooling_2d(x2, syn2, L, batch_tile=16))
    np.testing.assert_allclose(np.asarray(out2), np.asarray(_ref_forward(x2, syn2, L)),
                               rtol=1e-5, atol=1e-5)

    print("KERNEL_OK")
</pallas_src>

<mosaic_0001>
module attributes {stable_mosaic.version = 11 : i64} {
  func.func @_pooling_kernel(%arg0: i32, %arg1: memref<8x256xf32, #tpu.memory_space<vmem>>, %arg2: memref<8x16xf32, #tpu.memory_space<vmem>>, %arg3: memref<16x256xf32, #tpu.memory_space<vmem>>, %arg4: memref<4x256x256xf32, #tpu.memory_space<vmem>>, %arg5: memref<256x16xf32, #tpu.memory_space<vmem>>, %arg6: memref<8x16xf32, #tpu.memory_space<vmem>>) attributes {dimension_semantics = [#tpu.dimension_semantics<parallel>], iteration_bounds = array<i64: 1>, scalar_prefetch = 0 : i64, scratch_operands = 0 : i64, tpu.core_type = #tpu.core_type<tc>, window_params = [{transform_indices = @transform_0, window_bounds = array<i64: 8, 256>}, {transform_indices = @transform_1, window_bounds = array<i64: 8, 16>}, {pipeline_mode = #tpu.pipeline_mode<synchronous>, transform_indices = @transform_2, window_bounds = array<i64: 16, 256>}, {pipeline_mode = #tpu.pipeline_mode<synchronous>, transform_indices = @transform_3, window_bounds = array<i64: 4, 256, 256>}, {pipeline_mode = #tpu.pipeline_mode<synchronous>, transform_indices = @transform_4, window_bounds = array<i64: 256, 16>}, {transform_indices = @transform_5, window_bounds = array<i64: 8, 16>}]} {
    %c0 = arith.constant 0 : index
    %c0_0 = arith.constant 0 : index
    %0 = vector.load %arg1[%c0, %c0_0] : memref<8x256xf32, #tpu.memory_space<vmem>>, vector<8x256xf32>
    %c0_1 = arith.constant 0 : index
    %c0_2 = arith.constant 0 : index
    %1 = vector.load %arg2[%c0_1, %c0_2] : memref<8x16xf32, #tpu.memory_space<vmem>>, vector<8x16xf32>
    %c0_3 = arith.constant 0 : index
    %c0_4 = arith.constant 0 : index
    %2 = vector.load %arg3[%c0_3, %c0_4] : memref<16x256xf32, #tpu.memory_space<vmem>>, vector<16x256xf32>
    %cst = arith.constant dense<0.000000e+00> : vector<8x256xf32>
    %3 = tpu.matmul %1, %2, %cst {dimension_numbers = #tpu.dot_dimension_numbers<[1], [0], [0], [1], [0, 0, 1, 1], [], []>} : vector<8x16xf32>, vector<16x256xf32>, vector<8x256xf32> -> vector<8x256xf32>
    %4 = arith.fptosi %3 : vector<8x256xf32> to vector<8x256xi32>
    %c0_5 = arith.constant 0 : index
    %c0_6 = arith.constant 0 : index
    %c0_7 = arith.constant 0 : index
    %5 = vector.load %arg4[%c0_5, %c0_6, %c0_7] : memref<4x256x256xf32, #tpu.memory_space<vmem>>, vector<1x256x256xf32>
    %6 = vector.shape_cast %5 : vector<1x256x256xf32> to vector<256x256xf32>
    %cst_8 = arith.constant dense<0.000000e+00> : vector<8x256xf32>
    %7 = tpu.matmul %0, %6, %cst_8 {dimension_numbers = #tpu.dot_dimension_numbers<[1], [0], [0], [1], [0, 0, 1, 1], [], []>} : vector<8x256xf32>, vector<256x256xf32>, vector<8x256xf32> -> vector<8x256xf32>
    %c1_i32 = arith.constant 1 : i32
    %8 = vector.broadcast %c1_i32 : i32 to vector<8x256xi32>
    %9 = arith.andi %4, %8 : vector<8x256xi32>
    %c0_i32 = arith.constant 0 : i32
    %10 = vector.broadcast %c0_i32 : i32 to vector<8x256xi32>
    %11 = arith.cmpi ne, %9, %10 : vector<8x256xi32>
    %12 = arith.select %11, %7, %0 : vector<8x256xi1>, vector<8x256xf32>
    %c1 = arith.constant 1 : index
    %c0_9 = arith.constant 0 : index
    %c0_10 = arith.constant 0 : index
    %13 = vector.load %arg4[%c1, %c0_9, %c0_10] : memref<4x256x256xf32, #tpu.memory_space<vmem>>, vector<1x256x256xf32>
    %14 = vector.shape_cast %13 : vector<1x256x256xf32> to vector<256x256xf32>
    %cst_11 = arith.constant dense<0.000000e+00> : vector<8x256xf32>
    %15 = tpu.matmul %12, %14, %cst_11 {dimension_numbers = #tpu.dot_dimension_numbers<[1], [0], [0], [1], [0, 0, 1, 1], [], []>} : vector<8x256xf32>, vector<256x256xf32>, vector<8x256xf32> -> vector<8x256xf32>
    %c2_i32 = arith.constant 2 : i32
    %16 = vector.broadcast %c2_i32 : i32 to vector<8x256xi32>
    %17 = arith.andi %4, %16 : vector<8x256xi32>
    %c0_i32_12 = arith.constant 0 : i32
    %18 = vector.broadcast %c0_i32_12 : i32 to vector<8x256xi32>
    %19 = arith.cmpi ne, %17, %18 : vector<8x256xi32>
    %20 = arith.select %19, %15, %12 : vector<8x256xi1>, vector<8x256xf32>
    %c2 = arith.constant 2 : index
    %c0_13 = arith.constant 0 : index
    %c0_14 = arith.constant 0 : index
    %21 = vector.load %arg4[%c2, %c0_13, %c0_14] : memref<4x256x256xf32, #tpu.memory_space<vmem>>, vector<1x256x256xf32>
    %22 = vector.shape_cast %21 : vector<1x256x256xf32> to vector<256x256xf32>
    %cst_15 = arith.constant dense<0.000000e+00> : vector<8x256xf32>
    %23 = tpu.matmul %20, %22, %cst_15 {dimension_numbers = #tpu.dot_dimension_numbers<[1], [0], [0], [1], [0, 0, 1, 1], [], []>} : vector<8x256xf32>, vector<256x256xf32>, vector<8x256xf32> -> vector<8x256xf32>
    %c4_i32 = arith.constant 4 : i32
    %24 = vector.broadcast %c4_i32 : i32 to vector<8x256xi32>
    %25 = arith.andi %4, %24 : vector<8x256xi32>
    %c0_i32_16 = arith.constant 0 : i32
    %26 = vector.broadcast %c0_i32_16 : i32 to vector<8x256xi32>
    %27 = arith.cmpi ne, %25, %26 : vector<8x256xi32>
    %28 = arith.select %27, %23, %20 : vector<8x256xi1>, vector<8x256xf32>
    %c3 = arith.constant 3 : index
    %c0_17 = arith.constant 0 : index
    %c0_18 = arith.constant 0 : index
    %29 = vector.load %arg4[%c3, %c0_17, %c0_18] : memref<4x256x256xf32, #tpu.memory_space<vmem>>, vector<1x256x256xf32>
    %30 = vector.shape_cast %29 : vector<1x256x256xf32> to vector<256x256xf32>
    %cst_19 = arith.constant dense<0.000000e+00> : vector<8x256xf32>
    %31 = tpu.matmul %28, %30, %cst_19 {dimension_numbers = #tpu.dot_dimension_numbers<[1], [0], [0], [1], [0, 0, 1, 1], [], []>} : vector<8x256xf32>, vector<256x256xf32>, vector<8x256xf32> -> vector<8x256xf32>
    %c8_i32 = arith.constant 8 : i32
    %32 = vector.broadcast %c8_i32 : i32 to vector<8x256xi32>
    %33 = arith.andi %4, %32 : vector<8x256xi32>
    %c0_i32_20 = arith.constant 0 : i32
    %34 = vector.broadcast %c0_i32_20 : i32 to vector<8x256xi32>
    %35 = arith.cmpi ne, %33, %34 : vector<8x256xi32>
    %36 = arith.select %35, %31, %28 : vector<8x256xi1>, vector<8x256xf32>
    %c0_21 = arith.constant 0 : index
    %c0_22 = arith.constant 0 : index
    %37 = vector.load %arg5[%c0_21, %c0_22] : memref<256x16xf32, #tpu.memory_space<vmem>>, vector<256x16xf32>
    %cst_23 = arith.constant dense<0.000000e+00> : vector<8x16xf32>
    %38 = tpu.matmul %36, %37, %cst_23 {dimension_numbers = #tpu.dot_dimension_numbers<[1], [0], [0], [1], [0, 0, 1, 1], [], []>} : vector<8x256xf32>, vector<256x16xf32>, vector<8x16xf32> -> vector<8x16xf32>
    %c0_24 = arith.constant 0 : index
    %c0_25 = arith.constant 0 : index
    %39 = vector.load %arg6[%c0_24, %c0_25] : memref<8x16xf32, #tpu.memory_space<vmem>>, vector<8x16xf32>
    tpu.vector_store %arg6[%c0_24, %c0_25], %38 {strides = array<i32>} : memref<8x16xf32, #tpu.memory_space<vmem>>, vector<8x16xf32>,
    return
  }
  func.func @transform_0(%arg0: i32) -> (i32, i32) {
    %c0_i32 = arith.constant 0 : i32
    %c0_i32_0 = arith.constant 0 : i32
    return %arg0, %c0_i32 : i32, i32
  }
  func.func @transform_1(%arg0: i32) -> (i32, i32) {
    %c0_i32 = arith.constant 0 : i32
    %c0_i32_0 = arith.constant 0 : i32
    return %arg0, %c0_i32 : i32, i32
  }
  func.func @transform_2(%arg0: i32) -> (i32, i32) {
    %c0_i32 = arith.constant 0 : i32
    %c0_i32_0 = arith.constant 0 : i32
    %c0_i32_1 = arith.constant 0 : i32
    return %c0_i32, %c0_i32_0 : i32, i32
  }
  func.func @transform_3(%arg0: i32) -> (i32, i32, i32) {
    %c0_i32 = arith.constant 0 : i32
    %c0_i32_0 = arith.constant 0 : i32
    %c0_i32_1 = arith.constant 0 : i32
    %c0_i32_2 = arith.constant 0 : i32
    return %c0_i32, %c0_i32_0, %c0_i32_1 : i32, i32, i32
  }
  func.func @transform_4(%arg0: i32) -> (i32, i32) {
    %c0_i32 = arith.constant 0 : i32
    %c0_i32_0 = arith.constant 0 : i32
    %c0_i32_1 = arith.constant 0 : i32
    return %c0_i32, %c0_i32_0 : i32, i32
  }
  func.func @transform_5(%arg0: i32) -> (i32, i32) {
    %c0_i32 = arith.constant 0 : i32
    %c0_i32_0 = arith.constant 0 : i32
    return %arg0, %c0_i32 : i32, i32
  }
}

</mosaic_0001>

<llo_original>
// kernel: tpu_custom_call.1
$region0: #{tpu_custom_call.1}
  #allocation0 [shape = 'u32[]', space=smem, size = 0x4, offset = 0x4, fixed_abs, tag = 'smem constant byte address 0x4 - core index']
  #allocation1 [shape = 'u32[144,128]{1,0:T(1,128)}', space=vmem, size = 0x12000, scoped, tag = 'internal scratch']
  %s0 = inlined_call_operand.vmem [shape: f32[8,256], index: 0, kind: input, shape index: {}]
  %s1 = inlined_call_operand.vmem [shape: f32[8,16], index: 1, kind: input, shape index: {}]
  %s2 = inlined_call_operand.vmem [shape: f32[16,256], index: 2, kind: input, shape index: {}]
  %s3 = inlined_call_operand.hbm [shape: f32[4,256,256], index: 3, kind: input, shape index: {}]
  %s4 = inlined_call_operand.vmem [shape: f32[256,16], index: 4, kind: input, shape index: {}]
  %s5 = inlined_call_operand.hbm [shape: f32[8,16], index: 5, kind: output, shape index: {}]
  %s6 = sld [smem:[#allocation0]]
  $region34: #{tpu_custom_call.1} parent=0
    _
  %s8 = ssub.s32 1, %s6
  %s9 = scalar_select 0, %s8, %s6
  $region1: #{tpu_custom_call.1} parent=0
    #allocation2 [shape = 'u8[1048576]{0}', space=vmem, size = 0x100000, scoped, tag = 'input window, operand 3, single buffered']
    #allocation3 [shape = 's32[1]{0}', space=sflag, size = 0x4, scoped, tag = 'scoped memory for tpu_custom_call.1']
    #allocation4 [shape = 's32[1]{0}', space=sflag, size = 0x4, scoped, tag = 'scoped memory for tpu_custom_call.1']
    #allocation5 [shape = 'u8[4096]{0}', space=vmem, size = 0x1000, scoped, tag = 'output window, operand 0, single buffered']
    %10 = vsyncpa [#allocation3], 0
    %11 = vsyncpa [#allocation4], 0
    // Predicated region
    $region2: #{tpu_custom_call.1} parent=1 // pred_check
      _
    $region3: #{tpu_custom_call.1} parent=1 // pred_check_branch
      %13 = sbr.rel (0) target = $region5
    $region4: #{tpu_custom_call.1} parent=1 // pred_region
      _
    $region5: #{tpu_custom_call.1} parent=1 // pred_fallthru
      _
    // Predicated region
    $region6: #{tpu_custom_call.1} parent=1 // pred_check
      _
    $region7: #{tpu_custom_call.1} parent=1 // pred_check_branch
      %15 = sbr.rel (0) target = $region9
    $region8: #{tpu_custom_call.1} parent=1 // pred_region
      _
    $region9: #{tpu_custom_call.1} parent=1 // pred_fallthru
      _
    // Predicated region
    $region10: #{tpu_custom_call.1} parent=1 // pred_check
      _
    $region11: #{tpu_custom_call.1} parent=1 // pred_check_branch
      %17 = sbr.rel (0) target = $region13
    $region12: #{tpu_custom_call.1} parent=1 // pred_region
      _
    $region13: #{tpu_custom_call.1} parent=1 // pred_fallthru
      _
    // Predicated region
    $region14: #{tpu_custom_call.1} parent=1 // pred_check
      _
    $region15: #{tpu_custom_call.1} parent=1 // pred_check_branch
      %19 = sbr.rel (0) target = $region17
    $region16: #{tpu_custom_call.1} parent=1 // pred_region
      %s21 = ssub.s32 32768, 32768
      %22 = vsyncadd [#allocation3], %s21
      %s23 = sshll.u32 [#allocation2], 4
      %s24 = int_to_ptr.vmem [resolvable:$true] %s23
      %29 = dma.hbm_to_vmem [thread:$0]  %s3, 32768, %s24, [#allocation3], 256, 256, 16
    $region17: #{tpu_custom_call.1} parent=1 // pred_fallthru
      _
    // Predicated region
    $region18: #{tpu_custom_call.1} parent=1 // pred_check
      _
    $region19: #{tpu_custom_call.1} parent=1 // pred_check_branch
      %31 = sbr.rel (0) target = $region21
    $region20: #{tpu_custom_call.1} parent=1 // pred_region
      _
    $region21: #{tpu_custom_call.1} parent=1 // pred_fallthru
      _
    // Predicated region
    $region22: #{tpu_custom_call.1} parent=1 // pred_check
      _
    $region23: #{tpu_custom_call.1} parent=1 // pred_check_branch
      %33 = sbr.rel (0) target = $region25
    $region24: #{tpu_custom_call.1} parent=1 // pred_region
      %34 = dma.done [#allocation3], 32768
    $region25: #{tpu_custom_call.1} parent=1 // pred_fallthru
      _
    %v35 = vld [vmem:[%s0] sm:$0xff]
    %v36 = vld [vmem:[%s0 + $0x8] sm:$0xff]
    %v37 = vld [vmem:[%s1] sm:$0xff]
    %v38 = vld [vmem:[%s2] sm:$0xff]
    %v39 = vld [vmem:[%s2 + $0x8] sm:$0xff]
    %v40 = vld [vmem:[%s2 + $0x10] sm:$0xff]
    %v41 = vld [vmem:[%s2 + $0x18] sm:$0xff]
    %vm42 = vcmask 130048
    %v44 = vsel %vm42, %v37, 0
    %46 = vmatprep.subr.mxu0 %v39
    %47 = vmatpush1.msra.mxu0 %v38
    %48 = vmatprep.subr.mxu0 %v41
    %49 = vmatpush1.msra.mxu0 %v40
    %50 = vmatprep.subr.mxu0 0.0
    %51 = vmatpush1.msra.mxu0 0.0
    %52 = vmatprep.subr.mxu0 0.0
    %53 = vmatpush1.msra.mxu0 0.0
    %54 = vmatprep.subr.mxu0 0.0
    %55 = vmatpush1.msra.mxu0 0.0
    %56 = vmatprep.subr.mxu0 0.0
    %57 = vmatpush1.msra.mxu0 0.0
    %58 = vmatprep.subr.mxu0 0.0
    %59 = vmatpush1.msra.mxu0 0.0
    %60 = vmatprep.subr.mxu0 0.0
    %61 = vmatpush1.msra.mxu0 0.0
    %62 = vmatprep.subr.mxu0 0.0
    %63 = vmatpush1.msra.mxu0 0.0
    %64 = vmatprep.subr.mxu0 0.0
    %65 = vmatpush1.msra.mxu0 0.0
    %66 = vmatprep.subr.mxu0 0.0
    %67 = vmatpush1.msra.mxu0 0.0
    %68 = vmatprep.subr.mxu0 0.0
    %69 = vmatpush1.msra.mxu0 0.0
    %70 = vmatprep.subr.mxu0 0.0
    %71 = vmatpush1.msra.mxu0 0.0
    %72 = vmatprep.subr.mxu0 0.0
    %73 = vmatpush1.msra.mxu0 0.0
    %74 = vmatprep.subr.mxu0 0.0
    %75 = vmatpush1.msra.mxu0 0.0
    %76 = vmatprep.subr.mxu0 0.0
    %77 = vmatpush1.msra.mxu0 0.0
    %78 = vmatprep.subr.mxu0 0.0
    %79 = vmatpush1.msra.mxu0 0.0
    %80 = vmatprep.subr.mxu0 0.0
    %81 = vmatpush1.msra.mxu0 0.0
    %82 = vmatprep.subr.mxu0 0.0
    %83 = vmatpush1.msra.mxu0 0.0
    %84 = vmatprep.subr.mxu0 0.0
    %85 = vmatpush1.msra.mxu0 0.0
    %86 = vmatprep.subr.mxu0 0.0
    %87 = vmatpush1.msra.mxu0 0.0
    %88 = vmatprep.subr.mxu0 0.0
    %89 = vmatpush1.msra.mxu0 0.0
    %90 = vmatprep.subr.mxu0 0.0
    %91 = vmatpush1.msra.mxu0 0.0
    %92 = vmatprep.subr.mxu0 0.0
    %93 = vmatpush1.msra.mxu0 0.0
    %94 = vmatprep.subr.mxu0 0.0
    %95 = vmatpush1.msra.mxu0 0.0
    %96 = vmatprep.subr.mxu0 0.0
    %97 = vmatpush1.msra.mxu0 0.0
    %98 = vmatprep.subr.mxu0 0.0
    %99 = vmatpush1.msra.mxu0 0.0
    %100 = vmatprep.subr.mxu0 0.0
    %101 = vmatpush1.msra.mxu0 0.0
    %102 = vmatprep.subr.mxu0 0.0
    %103 = vmatpush1.msra.mxu0 0.0
    %104 = vmatprep.subr.mxu0 0.0
    %105 = vmatpush1.msra.mxu0 0.0
    %106 = vmatprep.subr.mxu0 0.0
    %107 = vmatpush1.msra.mxu0 0.0
    %108 = vmatprep.subr.mxu0 0.0
    %109 = vmatpush1.msra.mxu0 0.0
    %110 = vmatprep.mubr.f32.mxu0 0.0
    %111 = vmatmul.mubr.f32.gmra.mrb[0].mxu0 %v44
    %v112 = vpop.f32.mrb[0].mxu0
    %v113 = vadd.f32 0.0, %v112
    %v114 = vpop.f32.mrb[0].mxu0
    %v115 = vadd.f32 0.0, %v114
    %116 = vdwg.mxu0
    %v117 = vcvt.f32.s32.to.zero.pseudo %v113
    %v118 = vcvt.f32.s32.to.zero.pseudo %v115
    %v119 = vld [vmem:[#allocation2] sm:$0xff]
    %v120 = vld [vmem:[#allocation2 + $0x8] sm:$0xff]
    %v121 = vld [vmem:[#allocation2 + $0x10] sm:$0xff]
    %v122 = vld [vmem:[#allocation2 + $0x18] sm:$0xff]
    %v123 = vld [vmem:[#allocation2 + $0x20] sm:$0xff]
    %v124 = vld [vmem:[#allocation2 + $0x28] sm:$0xff]
    %v125 = vld [vmem:[#allocation2 + $0x30] sm:$0xff]
    %v126 = vld [vmem:[#allocation2 + $0x38] sm:$0xff]
    %v127 = vld [vmem:[#allocation2 + $0x40] sm:$0xff]
    %v128 = vld [vmem:[#allocation2 + $0x48] sm:$0xff]
    %v129 = vld [vmem:[#allocation2 + $0x50] sm:$0xff]
    %v130 = vld [vmem:[#allocation2 + $0x58] sm:$0xff]
    %v131 = vld [vmem:[#allocation2 + $0x60] sm:$0xff]
    %v132 = vld [vmem:[#allocation2 + $0x68] sm:$0xff]
    %v133 = vld [vmem:[#allocation2 + $0x70] sm:$0xff]
    %v134 = vld [vmem:[#allocation2 + $0x78] sm:$0xff]
    %v135 = vld [vmem:[#allocation2 + $0x80] sm:$0xff]
    %v136 = vld [vmem:[#allocation2 + $0x88] sm:$0xff]
    %v137 = vld [vmem:[#allocation2 + $0x90] sm:$0xff]
    %v138 = vld [vmem:[#allocation2 + $0x98] sm:$0xff]
    %v139 = vld [vmem:[#allocation2 + $0xa0] sm:$0xff]
    %v140 = vld [vmem:[#allocation2 + $0xa8] sm:$0xff]
    %v141 = vld [vmem:[#allocation2 + $0xb0] sm:$0xff]
    %v142 = vld [vmem:[#allocation2 + $0xb8] sm:$0xff]
    %v143 = vld [vmem:[#allocation2 + $0xc0] sm:$0xff]
    %v144 = vld [vmem:[#allocation2 + $0xc8] sm:$0xff]
    %v145 = vld [vmem:[#allocation2 + $0xd0] sm:$0xff]
    %v146 = vld [vmem:[#allocation2 + $0xd8] sm:$0xff]
    %v147 = vld [vmem:[#allocation2 + $0xe0] sm:$0xff]
    %v148 = vld [vmem:[#allocation2 + $0xe8] sm:$0xff]
    %v149 = vld [vmem:[#allocation2 + $0xf0] sm:$0xff]
    %v150 = vld [vmem:[#allocation2 + $0xf8] sm:$0xff]
    %v151 = vld [vmem:[#allocation2 + $0x100] sm:$0xff]
    %v152 = vld [vmem:[#allocation2 + $0x108] sm:$0xff]
    %v153 = vld [vmem:[#allocation2 + $0x110] sm:$0xff]
    %v154 = vld [vmem:[#allocation2 + $0x118] sm:$0xff]
    %v155 = vld [vmem:[#allocation2 + $0x120] sm:$0xff]
    %v156 = vld [vmem:[#allocation2 + $0x128] sm:$0xff]
    %v157 = vld [vmem:[#allocation2 + $0x130] sm:$0xff]
    %v158 = vld [vmem:[#allocation2 + $0x138] sm:$0xff]
    %v159 = vld [vmem:[#allocation2 + $0x140] sm:$0xff]
    %v160 = vld [vmem:[#allocation2 + $0x148] sm:$0xff]
    %v161 = vld [vmem:[#allocation2 + $0x150] sm:$0xff]
    %v162 = vld [vmem:[#allocation2 + $0x158] sm:$0xff]
    %v163 = vld [vmem:[#allocation2 + $0x160] sm:$0xff]
    %v164 = vld [vmem:[#allocation2 + $0x168] sm:$0xff]
    %v165 = vld [vmem:[#allocation2 + $0x170] sm:$0xff]
    %v166 = vld [vmem:[#allocation2 + $0x178] sm:$0xff]
    %v167 = vld [vmem:[#allocation2 + $0x180] sm:$0xff]
    %v168 = vld [vmem:[#allocation2 + $0x188] sm:$0xff]
    %v169 = vld [vmem:[#allocation2 + $0x190] sm:$0xff]
    %v170 = vld [vmem:[#allocation2 + $0x198] sm:$0xff]
    %v171 = vld [vmem:[#allocation2 + $0x1a0] sm:$0xff]
    %v172 = vld [vmem:[#allocation2 + $0x1a8] sm:$0xff]
    %v173 = vld [vmem:[#allocation2 + $0x1b0] sm:$0xff]
    %v174 = vld [vmem:[#allocation2 + $0x1b8] sm:$0xff]
    %v175 = vld [vmem:[#allocation2 + $0x1c0] sm:$0xff]
    %v176 = vld [vmem:[#allocation2 + $0x1c8] sm:$0xff]
    %v177 = vld [vmem:[#allocation2 + $0x1d0] sm:$0xff]
    %v178 = vld [vmem:[#allocation2 + $0x1d8] sm:$0xff]
    %v179 = vld [vmem:[#allocation2 + $0x1e0] sm:$0xff]
    %v180 = vld [vmem:[#allocation2 + $0x1e8] sm:$0xff]
    %v181 = vld [vmem:[#allocation2 + $0x1f0] sm:$0xff]
    %v182 = vld [vmem:[#allocation2 + $0x1f8] sm:$0xff]
    %183 = vmatprep.subr.mxu0 %v120
    %184 = vmatpush1.msra.mxu0 %v119
    %185 = vmatprep.subr.mxu0 %v122
    %186 = vmatpush1.msra.mxu0 %v121
    %187 = vmatprep.subr.mxu0 %v124
    %188 = vmatpush1.msra.mxu0 %v123
    %189 = vmatprep.subr.mxu0 %v126
    %190 = vmatpush1.msra.mxu0 %v125
    %191 = vmatprep.subr.mxu0 %v128
    %192 = vmatpush1.msra.mxu0 %v127
    %193 = vmatprep.subr.mxu0 %v130
    %194 = vmatpush1.msra.mxu0 %v129
    %195 = vmatprep.subr.mxu0 %v132
    %196 = vmatpush1.msra.mxu0 %v131
    %197 = vmatprep.subr.mxu0 %v134
    %198 = vmatpush1.msra.mxu0 %v133
    %199 = vmatprep.subr.mxu0 %v136
    %200 = vmatpush1.msra.mxu0 %v135
    %201 = vmatprep.subr.mxu0 %v138
    %202 = vmatpush1.msra.mxu0 %v137
    %203 = vmatprep.subr.mxu0 %v140
    %204 = vmatpush1.msra.mxu0 %v139
    %205 = vmatprep.subr.mxu0 %v142
    %206 = vmatpush1.msra.mxu0 %v141
    %207 = vmatprep.subr.mxu0 %v144
    %208 = vmatpush1.msra.mxu0 %v143
    %209 = vmatprep.subr.mxu0 %v146
    %210 = vmatpush1.msra.mxu0 %v145
    %211 = vmatprep.subr.mxu0 %v148
    %212 = vmatpush1.msra.mxu0 %v147
    %213 = vmatprep.subr.mxu0 %v150
    %214 = vmatpush1.msra.mxu0 %v149
    %215 = vmatprep.subr.mxu0 %v152
    %216 = vmatpush1.msra.mxu0 %v151
    %217 = vmatprep.subr.mxu0 %v154
    %218 = vmatpush1.msra.mxu0 %v153
    %219 = vmatprep.subr.mxu0 %v156
    %220 = vmatpush1.msra.mxu0 %v155
    %221 = vmatprep.subr.mxu0 %v158
    %222 = vmatpush1.msra.mxu0 %v157
    %223 = vmatprep.subr.mxu0 %v160
    %224 = vmatpush1.msra.mxu0 %v159
    %225 = vmatprep.subr.mxu0 %v162
    %226 = vmatpush1.msra.mxu0 %v161
    %227 = vmatprep.subr.mxu0 %v164
    %228 = vmatpush1.msra.mxu0 %v163
    %229 = vmatprep.subr.mxu0 %v166
    %230 = vmatpush1.msra.mxu0 %v165
    %231 = vmatprep.subr.mxu0 %v168
    %232 = vmatpush1.msra.mxu0 %v167
    %233 = vmatprep.subr.mxu0 %v170
    %234 = vmatpush1.msra.mxu0 %v169
    %235 = vmatprep.subr.mxu0 %v172
    %236 = vmatpush1.msra.mxu0 %v171
    %237 = vmatprep.subr.mxu0 %v174
    %238 = vmatpush1.msra.mxu0 %v173
    %239 = vmatprep.subr.mxu0 %v176
    %240 = vmatpush1.msra.mxu0 %v175
    %241 = vmatprep.subr.mxu0 %v178
    %242 = vmatpush1.msra.mxu0 %v177
    %243 = vmatprep.subr.mxu0 %v180
    %244 = vmatpush1.msra.mxu0 %v179
    %245 = vmatprep.subr.mxu0 %v182
    %246 = vmatpush1.msra.mxu0 %v181
    %247 = vmatprep.mubr.f32.mxu0 %v36
    %248 = vmatmul.mubr.f32.gmra.mrb[0].mxu0 %v35
    %v249 = vpop.f32.mrb[0].mxu0
    %v250 = vadd.f32 0.0, %v249
    %v251 = vpop.f32.mrb[0].mxu0
    %v252 = vadd.f32 0.0, %v251
    %253 = vdwg.mxu0
    %v254 = vand.u32 %v117, 1
    %v255 = vand.u32 %v118, 1
    %vm256 = vcmp.ne.s32.totalorder %v254, 0
    %vm257 = vcmp.ne.s32.totalorder %v255, 0
    %v258 = vsel %vm256, %v250, %v35
    %v259 = vsel %vm257, %v252, %v36
    %s260 = scalar_lea.vmem [#allocation2], 512
    %v261 = vld [vmem:[%s260] sm:$0xff]
    %v262 = vld [vmem:[%s260 + $0x8] sm:$0xff]
    %v263 = vld [vmem:[%s260 + $0x10] sm:$0xff]
    %v264 = vld [vmem:[%s260 + $0x18] sm:$0xff]
    %v265 = vld [vmem:[%s260 + $0x20] sm:$0xff]
    %v266 = vld [vmem:[%s260 + $0x28] sm:$0xff]
    %v267 = vld [vmem:[%s260 + $0x30] sm:$0xff]
    %v268 = vld [vmem:[%s260 + $0x38] sm:$0xff]
    %v269 = vld [vmem:[%s260 + $0x40] sm:$0xff]
    %v270 = vld [vmem:[%s260 + $0x48] sm:$0xff]
    %v271 = vld [vmem:[%s260 + $0x50] sm:$0xff]
    %v272 = vld [vmem:[%s260 + $0x58] sm:$0xff]
    %v273 = vld [vmem:[%s260 + $0x60] sm:$0xff]
    %v274 = vld [vmem:[%s260 + $0x68] sm:$0xff]
    %v275 = vld [vmem:[%s260 + $0x70] sm:$0xff]
    %v276 = vld [vmem:[%s260 + $0x78] sm:$0xff]
    %v277 = vld [vmem:[%s260 + $0x80] sm:$0xff]
    %v278 = vld [vmem:[%s260 + $0x88] sm:$0xff]
    %v279 = vld [vmem:[%s260 + $0x90] sm:$0xff]
    %v280 = vld [vmem:[%s260 + $0x98] sm:$0xff]
    %v281 = vld [vmem:[%s260 + $0xa0] sm:$0xff]
    %v282 = vld [vmem:[%s260 + $0xa8] sm:$0xff]
    %v283 = vld [vmem:[%s260 + $0xb0] sm:$0xff]
    %v284 = vld [vmem:[%s260 + $0xb8] sm:$0xff]
    %v285 = vld [vmem:[%s260 + $0xc0] sm:$0xff]
    %v286 = vld [vmem:[%s260 + $0xc8] sm:$0xff]
    %v287 = vld [vmem:[%s260 + $0xd0] sm:$0xff]
    %v288 = vld [vmem:[%s260 + $0xd8] sm:$0xff]
    %v289 = vld [vmem:[%s260 + $0xe0] sm:$0xff]
    %v290 = vld [vmem:[%s260 + $0xe8] sm:$0xff]
    %v291 = vld [vmem:[%s260 + $0xf0] sm:$0xff]
    %v292 = vld [vmem:[%s260 + $0xf8] sm:$0xff]
    %v293 = vld [vmem:[%s260 + $0x100] sm:$0xff]
    %v294 = vld [vmem:[%s260 + $0x108] sm:$0xff]
    %v295 = vld [vmem:[%s260 + $0x110] sm:$0xff]
    %v296 = vld [vmem:[%s260 + $0x118] sm:$0xff]
    %v297 = vld [vmem:[%s260 + $0x120] sm:$0xff]
    %v298 = vld [vmem:[%s260 + $0x128] sm:$0xff]
    %v299 = vld [vmem:[%s260 + $0x130] sm:$0xff]
    %v300 = vld [vmem:[%s260 + $0x138] sm:$0xff]
    %v301 = vld [vmem:[%s260 + $0x140] sm:$0xff]
    %v302 = vld [vmem:[%s260 + $0x148] sm:$0xff]
    %v303 = vld [vmem:[%s260 + $0x150] sm:$0xff]
    %v304 = vld [vmem:[%s260 + $0x158] sm:$0xff]
    %v305 = vld [vmem:[%s260 + $0x160] sm:$0xff]
    %v306 = vld [vmem:[%s260 + $0x168] sm:$0xff]
    %v307 = vld [vmem:[%s260 + $0x170] sm:$0xff]
    %v308 = vld [vmem:[%s260 + $0x178] sm:$0xff]
    %v309 = vld [vmem:[%s260 + $0x180] sm:$0xff]
    %v310 = vld [vmem:[%s260 + $0x188] sm:$0xff]
    %v311 = vld [vmem:[%s260 + $0x190] sm:$0xff]
    %v312 = vld [vmem:[%s260 + $0x198] sm:$0xff]
    %v313 = vld [vmem:[%s260 + $0x1a0] sm:$0xff]
    %v314 = vld [vmem:[%s260 + $0x1a8] sm:$0xff]
    %v315 = vld [vmem:[%s260 + $0x1b0] sm:$0xff]
    %v316 = vld [vmem:[%s260 + $0x1b8] sm:$0xff]
    %v317 = vld [vmem:[%s260 + $0x1c0] sm:$0xff]
    %v318 = vld [vmem:[%s260 + $0x1c8] sm:$0xff]
    %v319 = vld [vmem:[%s260 + $0x1d0] sm:$0xff]
    %v320 = vld [vmem:[%s260 + $0x1d8] sm:$0xff]
    %v321 = vld [vmem:[%s260 + $0x1e0] sm:$0xff]
    %v322 = vld [vmem:[%s260 + $0x1e8] sm:$0xff]
    %v323 = vld [vmem:[%s260 + $0x1f0] sm:$0xff]
    %v324 = vld [vmem:[%s260 + $0x1f8] sm:$0xff]
    %325 = vmatprep.subr.mxu0 %v262
    %326 = vmatpush1.msra.mxu0 %v261
    %327 = vmatprep.subr.mxu0 %v264
    %328 = vmatpush1.msra.mxu0 %v263
    %329 = vmatprep.subr.mxu0 %v266
    %330 = vmatpush1.msra.mxu0 %v265
    %331 = vmatprep.subr.mxu0 %v268
    %332 = vmatpush1.msra.mxu0 %v267
    %333 = vmatprep.subr.mxu0 %v270
    %334 = vmatpush1.msra.mxu0 %v269
    %335 = vmatprep.subr.mxu0 %v272
    %336 = vmatpush1.msra.mxu0 %v271
    %337 = vmatprep.subr.mxu0 %v274
    %338 = vmatpush1.msra.mxu0 %v273
    %339 = vmatprep.subr.mxu0 %v276
    %340 = vmatpush1.msra.mxu0 %v275
    %341 = vmatprep.subr.mxu0 %v278
    %342 = vmatpush1.msra.mxu0 %v277
    %343 = vmatprep.subr.mxu0 %v280
    %344 = vmatpush1.msra.mxu0 %v279
    %345 = vmatprep.subr.mxu0 %v282
    %346 = vmatpush1.msra.mxu0 %v281
    %347 = vmatprep.subr.mxu0 %v284
    %348 = vmatpush1.msra.mxu0 %v283
    %349 = vmatprep.subr.mxu0 %v286
    %350 = vmatpush1.msra.mxu0 %v285
    %351 = vmatprep.subr.mxu0 %v288
    %352 = vmatpush1.msra.mxu0 %v287
    %353 = vmatprep.subr.mxu0 %v290
    %354 = vmatpush1.msra.mxu0 %v289
    %355 = vmatprep.subr.mxu0 %v292
    %356 = vmatpush1.msra.mxu0 %v291
    %357 = vmatprep.subr.mxu0 %v294
    %358 = vmatpush1.msra.mxu0 %v293
    %359 = vmatprep.subr.mxu0 %v296
    %360 = vmatpush1.msra.mxu0 %v295
    %361 = vmatprep.subr.mxu0 %v298
    %362 = vmatpush1.msra.mxu0 %v297
    %363 = vmatprep.subr.mxu0 %v300
    %364 = vmatpush1.msra.mxu0 %v299
    %365 = vmatprep.subr.mxu0 %v302
    %366 = vmatpush1.msra.mxu0 %v301
    %367 = vmatprep.subr.mxu0 %v304
    %368 = vmatpush1.msra.mxu0 %v303
    %369 = vmatprep.subr.mxu0 %v306
    %370 = vmatpush1.msra.mxu0 %v305
    %371 = vmatprep.subr.mxu0 %v308
    %372 = vmatpush1.msra.mxu0 %v307
    %373 = vmatprep.subr.mxu0 %v310
    %374 = vmatpush1.msra.mxu0 %v309
    %375 = vmatprep.subr.mxu0 %v312
    %376 = vmatpush1.msra.mxu0 %v311
    %377 = vmatprep.subr.mxu0 %v314
    %378 = vmatpush1.msra.mxu0 %v313
    %379 = vmatprep.subr.mxu0 %v316
    %380 = vmatpush1.msra.mxu0 %v315
    %381 = vmatprep.subr.mxu0 %v318
    %382 = vmatpush1.msra.mxu0 %v317
    %383 = vmatprep.subr.mxu0 %v320
    %384 = vmatpush1.msra.mxu0 %v319
    %385 = vmatprep.subr.mxu0 %v322
    %386 = vmatpush1.msra.mxu0 %v321
    %387 = vmatprep.subr.mxu0 %v324
    %388 = vmatpush1.msra.mxu0 %v323
    %389 = vmatprep.mubr.f32.mxu0 %v259
    %390 = vmatmul.mubr.f32.gmra.mrb[0].mxu0 %v258
    %v391 = vpop.f32.mrb[0].mxu0
    %v392 = vadd.f32 0.0, %v391
    %v393 = vpop.f32.mrb[0].mxu0
    %v394 = vadd.f32 0.0, %v393
    %395 = vdwg.mxu0
    %v396 = vand.u32 %v117, 2
    %v397 = vand.u32 %v118, 2
    %vm398 = vcmp.ne.s32.totalorder %v396, 0
    %vm399 = vcmp.ne.s32.totalorder %v397, 0
    %v400 = vsel %vm398, %v392, %v258
    %v401 = vsel %vm399, %v394, %v259
    %s402 = scalar_lea.vmem [#allocation2], 1024
    %v403 = vld [vmem:[%s402] sm:$0xff]
    %v404 = vld [vmem:[%s402 + $0x8] sm:$0xff]
    %v405 = vld [vmem:[%s402 + $0x10] sm:$0xff]
    %v406 = vld [vmem:[%s402 + $0x18] sm:$0xff]
    %v407 = vld [vmem:[%s402 + $0x20] sm:$0xff]
    %v408 = vld [vmem:[%s402 + $0x28] sm:$0xff]
    %v409 = vld [vmem:[%s402 + $0x30] sm:$0xff]
    %v410 = vld [vmem:[%s402 + $0x38] sm:$0xff]
    %v411 = vld [vmem:[%s402 + $0x40] sm:$0xff]
    %v412 = vld [vmem:[%s402 + $0x48] sm:$0xff]
    %v413 = vld [vmem:[%s402 + $0x50] sm:$0xff]
    %v414 = vld [vmem:[%s402 + $0x58] sm:$0xff]
    %v415 = vld [vmem:[%s402 + $0x60] sm:$0xff]
    %v416 = vld [vmem:[%s402 + $0x68] sm:$0xff]
    %v417 = vld [vmem:[%s402 + $0x70] sm:$0xff]
    %v418 = vld [vmem:[%s402 + $0x78] sm:$0xff]
    %v419 = vld [vmem:[%s402 + $0x80] sm:$0xff]
    %v420 = vld [vmem:[%s402 + $0x88] sm:$0xff]
    %v421 = vld [vmem:[%s402 + $0x90] sm:$0xff]
    %v422 = vld [vmem:[%s402 + $0x98] sm:$0xff]
    %v423 = vld [vmem:[%s402 + $0xa0] sm:$0xff]
    %v424 = vld [vmem:[%s402 + $0xa8] sm:$0xff]
    %v425 = vld [vmem:[%s402 + $0xb0] sm:$0xff]
    %v426 = vld [vmem:[%s402 + $0xb8] sm:$0xff]
    %v427 = vld [vmem:[%s402 + $0xc0] sm:$0xff]
    %v428 = vld [vmem:[%s402 + $0xc8] sm:$0xff]
    %v429 = vld [vmem:[%s402 + $0xd0] sm:$0xff]
    %v430 = vld [vmem:[%s402 + $0xd8] sm:$0xff]
    %v431 = vld [vmem:[%s402 + $0xe0] sm:$0xff]
    %v432 = vld [vmem:[%s402 + $0xe8] sm:$0xff]
    %v433 = vld [vmem:[%s402 + $0xf0] sm:$0xff]
    %v434 = vld [vmem:[%s402 + $0xf8] sm:$0xff]
    %v435 = vld [vmem:[%s402 + $0x100] sm:$0xff]
    %v436 = vld [vmem:[%s402 + $0x108] sm:$0xff]
    %v437 = vld [vmem:[%s402 + $0x110] sm:$0xff]
    %v438 = vld [vmem:[%s402 + $0x118] sm:$0xff]
    %v439 = vld [vmem:[%s402 + $0x120] sm:$0xff]
    %v440 = vld [vmem:[%s402 + $0x128] sm:$0xff]
    %v441 = vld [vmem:[%s402 + $0x130] sm:$0xff]
    %v442 = vld [vmem:[%s402 + $0x138] sm:$0xff]
    %v443 = vld [vmem:[%s402 + $0x140] sm:$0xff]
    %v444 = vld [vmem:[%s402 + $0x148] sm:$0xff]
    %v445 = vld [vmem:[%s402 + $0x150] sm:$0xff]
    %v446 = vld [vmem:[%s402 + $0x158] sm:$0xff]
    %v447 = vld [vmem:[%s402 + $0x160] sm:$0xff]
    %v448 = vld [vmem:[%s402 + $0x168] sm:$0xff]
    %v449 = vld [vmem:[%s402 + $0x170] sm:$0xff]
    %v450 = vld [vmem:[%s402 + $0x178] sm:$0xff]
    %v451 = vld [vmem:[%s402 + $0x180] sm:$0xff]
    %v452 = vld [vmem:[%s402 + $0x188] sm:$0xff]
    %v453 = vld [vmem:[%s402 + $0x190] sm:$0xff]
    %v454 = vld [vmem:[%s402 + $0x198] sm:$0xff]
    %v455 = vld [vmem:[%s402 + $0x1a0] sm:$0xff]
    %v456 = vld [vmem:[%s402 + $0x1a8] sm:$0xff]
    %v457 = vld [vmem:[%s402 + $0x1b0] sm:$0xff]
    %v458 = vld [vmem:[%s402 + $0x1b8] sm:$0xff]
    %v459 = vld [vmem:[%s402 + $0x1c0] sm:$0xff]
    %v460 = vld [vmem:[%s402 + $0x1c8] sm:$0xff]
    %v461 = vld [vmem:[%s402 + $0x1d0] sm:$0xff]
    %v462 = vld [vmem:[%s402 + $0x1d8] sm:$0xff]
    %v463 = vld [vmem:[%s402 + $0x1e0] sm:$0xff]
    %v464 = vld [vmem:[%s402 + $0x1e8] sm:$0xff]
    %v465 = vld [vmem:[%s402 + $0x1f0] sm:$0xff]
    %v466 = vld [vmem:[%s402 + $0x1f8] sm:$0xff]
    %467 = vmatprep.subr.mxu0 %v404
    %468 = vmatpush1.msra.mxu0 %v403
    %469 = vmatprep.subr.mxu0 %v406
    %470 = vmatpush1.msra.mxu0 %v405
    %471 = vmatprep.subr.mxu0 %v408
    %472 = vmatpush1.msra.mxu0 %v407
    %473 = vmatprep.subr.mxu0 %v410
    %474 = vmatpush1.msra.mxu0 %v409
    %475 = vmatprep.subr.mxu0 %v412
    %476 = vmatpush1.msra.mxu0 %v411
    %477 = vmatprep.subr.mxu0 %v414
    %478 = vmatpush1.msra.mxu0 %v413
    %479 = vmatprep.subr.mxu0 %v416
    %480 = vmatpush1.msra.mxu0 %v415
    %481 = vmatprep.subr.mxu0 %v418
    %482 = vmatpush1.msra.mxu0 %v417
    %483 = vmatprep.subr.mxu0 %v420
    %484 = vmatpush1.msra.mxu0 %v419
    %485 = vmatprep.subr.mxu0 %v422
    %486 = vmatpush1.msra.mxu0 %v421
    %487 = vmatprep.subr.mxu0 %v424
    %488 = vmatpush1.msra.mxu0 %v423
    %489 = vmatprep.subr.mxu0 %v426
    %490 = vmatpush1.msra.mxu0 %v425
    %491 = vmatprep.subr.mxu0 %v428
    %492 = vmatpush1.msra.mxu0 %v427
    %493 = vmatprep.subr.mxu0 %v430
    %494 = vmatpush1.msra.mxu0 %v429
    %495 = vmatprep.subr.mxu0 %v432
    %496 = vmatpush1.msra.mxu0 %v431
    %497 = vmatprep.subr.mxu0 %v434
    %498 = vmatpush1.msra.mxu0 %v433
    %499 = vmatprep.subr.mxu0 %v436
    %500 = vmatpush1.msra.mxu0 %v435
    %501 = vmatprep.subr.mxu0 %v438
    %502 = vmatpush1.msra.mxu0 %v437
    %503 = vmatprep.subr.mxu0 %v440
    %504 = vmatpush1.msra.mxu0 %v439
    %505 = vmatprep.subr.mxu0 %v442
    %506 = vmatpush1.msra.mxu0 %v441
    %507 = vmatprep.subr.mxu0 %v444
    %508 = vmatpush1.msra.mxu0 %v443
    %509 = vmatprep.subr.mxu0 %v446
    %510 = vmatpush1.msra.mxu0 %v445
    %511 = vmatprep.subr.mxu0 %v448
    %512 = vmatpush1.msra.mxu0 %v447
    %513 = vmatprep.subr.mxu0 %v450
    %514 = vmatpush1.msra.mxu0 %v449
    %515 = vmatprep.subr.mxu0 %v452
    %516 = vmatpush1.msra.mxu0 %v451
    %517 = vmatprep.subr.mxu0 %v454
    %518 = vmatpush1.msra.mxu0 %v453
    %519 = vmatprep.subr.mxu0 %v456
    %520 = vmatpush1.msra.mxu0 %v455
    %521 = vmatprep.subr.mxu0 %v458
    %522 = vmatpush1.msra.mxu0 %v457
    %523 = vmatprep.subr.mxu0 %v460
    %524 = vmatpush1.msra.mxu0 %v459
    %525 = vmatprep.subr.mxu0 %v462
    %526 = vmatpush1.msra.mxu0 %v461
    %527 = vmatprep.subr.mxu0 %v464
    %528 = vmatpush1.msra.mxu0 %v463
    %529 = vmatprep.subr.mxu0 %v466
    %530 = vmatpush1.msra.mxu0 %v465
    %531 = vmatprep.mubr.f32.mxu0 %v401
    %532 = vmatmul.mubr.f32.gmra.mrb[0].mxu0 %v400
    %v533 = vpop.f32.mrb[0].mxu0
    %v534 = vadd.f32 0.0, %v533
    %v535 = vpop.f32.mrb[0].mxu0
    %v536 = vadd.f32 0.0, %v535
    %537 = vdwg.mxu0
    %v538 = vand.u32 %v117, 4
    %v539 = vand.u32 %v118, 4
    %vm540 = vcmp.ne.s32.totalorder %v538, 0
    %vm541 = vcmp.ne.s32.totalorder %v539, 0
    %v542 = vsel %vm540, %v534, %v400
    %v543 = vsel %vm541, %v536, %v401
    %s544 = scalar_lea.vmem [#allocation2], 1536
    %v545 = vld [vmem:[%s544] sm:$0xff]
    %v546 = vld [vmem:[%s544 + $0x8] sm:$0xff]
    %v547 = vld [vmem:[%s544 + $0x10] sm:$0xff]
    %v548 = vld [vmem:[%s544 + $0x18] sm:$0xff]
    %v549 = vld [vmem:[%s544 + $0x20] sm:$0xff]
    %v550 = vld [vmem:[%s544 + $0x28] sm:$0xff]
    %v551 = vld [vmem:[%s544 + $0x30] sm:$0xff]
    %v552 = vld [vmem:[%s544 + $0x38] sm:$0xff]
    %v553 = vld [vmem:[%s544 + $0x40] sm:$0xff]
    %v554 = vld [vmem:[%s544 + $0x48] sm:$0xff]
    %v555 = vld [vmem:[%s544 + $0x50] sm:$0xff]
    %v556 = vld [vmem:[%s544 + $0x58] sm:$0xff]
    %v557 = vld [vmem:[%s544 + $0x60] sm:$0xff]
    %v558 = vld [vmem:[%s544 + $0x68] sm:$0xff]
    %v559 = vld [vmem:[%s544 + $0x70] sm:$0xff]
    %v560 = vld [vmem:[%s544 + $0x78] sm:$0xff]
    %v561 = vld [vmem:[%s544 + $0x80] sm:$0xff]
    %v562 = vld [vmem:[%s544 + $0x88] sm:$0xff]
    %v563 = vld [vmem:[%s544 + $0x90] sm:$0xff]
    %v564 = vld [vmem:[%s544 + $0x98] sm:$0xff]
    %v565 = vld [vmem:[%s544 + $0xa0] sm:$0xff]
    %v566 = vld [vmem:[%s544 + $0xa8] sm:$0xff]
    %v567 = vld [vmem:[%s544 + $0xb0] sm:$0xff]
    %v568 = vld [vmem:[%s544 + $0xb8] sm:$0xff]
    %v569 = vld [vmem:[%s544 + $0xc0] sm:$0xff]
    %v570 = vld [vmem:[%s544 + $0xc8] sm:$0xff]
    %v571 = vld [vmem:[%s544 + $0xd0] sm:$0xff]
    %v572 = vld [vmem:[%s544 + $0xd8] sm:$0xff]
    %v573 = vld [vmem:[%s544 + $0xe0] sm:$0xff]
    %v574 = vld [vmem:[%s544 + $0xe8] sm:$0xff]
    %v575 = vld [vmem:[%s544 + $0xf0] sm:$0xff]
    %v576 = vld [vmem:[%s544 + $0xf8] sm:$0xff]
    %v577 = vld [vmem:[%s544 + $0x100] sm:$0xff]
    %v578 = vld [vmem:[%s544 + $0x108] sm:$0xff]
    %v579 = vld [vmem:[%s544 + $0x110] sm:$0xff]
    %v580 = vld [vmem:[%s544 + $0x118] sm:$0xff]
    %v581 = vld [vmem:[%s544 + $0x120] sm:$0xff]
    %v582 = vld [vmem:[%s544 + $0x128] sm:$0xff]
    %v583 = vld [vmem:[%s544 + $0x130] sm:$0xff]
    %v584 = vld [vmem:[%s544 + $0x138] sm:$0xff]
    %v585 = vld [vmem:[%s544 + $0x140] sm:$0xff]
    %v586 = vld [vmem:[%s544 + $0x148] sm:$0xff]
    %v587 = vld [vmem:[%s544 + $0x150] sm:$0xff]
    %v588 = vld [vmem:[%s544 + $0x158] sm:$0xff]
    %v589 = vld [vmem:[%s544 + $0x160] sm:$0xff]
    %v590 = vld [vmem:[%s544 + $0x168] sm:$0xff]
    %v591 = vld [vmem:[%s544 + $0x170] sm:$0xff]
    %v592 = vld [vmem:[%s544 + $0x178] sm:$0xff]
    %v593 = vld [vmem:[%s544 + $0x180] sm:$0xff]
    %v594 = vld [vmem:[%s544 + $0x188] sm:$0xff]
    %v595 = vld [vmem:[%s544 + $0x190] sm:$0xff]
    %v596 = vld [vmem:[%s544 + $0x198] sm:$0xff]
    %v597 = vld [vmem:[%s544 + $0x1a0] sm:$0xff]
    %v598 = vld [vmem:[%s544 + $0x1a8] sm:$0xff]
    %v599 = vld [vmem:[%s544 + $0x1b0] sm:$0xff]
    %v600 = vld [vmem:[%s544 + $0x1b8] sm:$0xff]
    %v601 = vld [vmem:[%s544 + $0x1c0] sm:$0xff]
    %v602 = vld [vmem:[%s544 + $0x1c8] sm:$0xff]
    %v603 = vld [vmem:[%s544 + $0x1d0] sm:$0xff]
    %v604 = vld [vmem:[%s544 + $0x1d8] sm:$0xff]
    %v605 = vld [vmem:[%s544 + $0x1e0] sm:$0xff]
    %v606 = vld [vmem:[%s544 + $0x1e8] sm:$0xff]
    %v607 = vld [vmem:[%s544 + $0x1f0] sm:$0xff]
    %v608 = vld [vmem:[%s544 + $0x1f8] sm:$0xff]
    %609 = vmatprep.subr.mxu0 %v546
    %610 = vmatpush1.msra.mxu0 %v545
    %611 = vmatprep.subr.mxu0 %v548
    %612 = vmatpush1.msra.mxu0 %v547
    %613 = vmatprep.subr.mxu0 %v550
    %614 = vmatpush1.msra.mxu0 %v549
    %615 = vmatprep.subr.mxu0 %v552
    %616 = vmatpush1.msra.mxu0 %v551
    %617 = vmatprep.subr.mxu0 %v554
    %618 = vmatpush1.msra.mxu0 %v553
    %619 = vmatprep.subr.mxu0 %v556
    %620 = vmatpush1.msra.mxu0 %v555
    %621 = vmatprep.subr.mxu0 %v558
    %622 = vmatpush1.msra.mxu0 %v557
    %623 = vmatprep.subr.mxu0 %v560
    %624 = vmatpush1.msra.mxu0 %v559
    %625 = vmatprep.subr.mxu0 %v562
    %626 = vmatpush1.msra.mxu0 %v561
    %627 = vmatprep.subr.mxu0 %v564
    %628 = vmatpush1.msra.mxu0 %v563
    %629 = vmatprep.subr.mxu0 %v566
    %630 = vmatpush1.msra.mxu0 %v565
    %631 = vmatprep.subr.mxu0 %v568
    %632 = vmatpush1.msra.mxu0 %v567
    %633 = vmatprep.subr.mxu0 %v570
    %634 = vmatpush1.msra.mxu0 %v569
    %635 = vmatprep.subr.mxu0 %v572
    %636 = vmatpush1.msra.mxu0 %v571
    %637 = vmatprep.subr.mxu0 %v574
    %638 = vmatpush1.msra.mxu0 %v573
    %639 = vmatprep.subr.mxu0 %v576
    %640 = vmatpush1.msra.mxu0 %v575
    %641 = vmatprep.subr.mxu0 %v578
    %642 = vmatpush1.msra.mxu0 %v577
    %643 = vmatprep.subr.mxu0 %v580
    %644 = vmatpush1.msra.mxu0 %v579
    %645 = vmatprep.subr.mxu0 %v582
    %646 = vmatpush1.msra.mxu0 %v581
    %647 = vmatprep.subr.mxu0 %v584
    %648 = vmatpush1.msra.mxu0 %v583
    %649 = vmatprep.subr.mxu0 %v586
    %650 = vmatpush1.msra.mxu0 %v585
    %651 = vmatprep.subr.mxu0 %v588
    %652 = vmatpush1.msra.mxu0 %v587
    %653 = vmatprep.subr.mxu0 %v590
    %654 = vmatpush1.msra.mxu0 %v589
    %655 = vmatprep.subr.mxu0 %v592
    %656 = vmatpush1.msra.mxu0 %v591
    %657 = vmatprep.subr.mxu0 %v594
    %658 = vmatpush1.msra.mxu0 %v593
    %659 = vmatprep.subr.mxu0 %v596
    %660 = vmatpush1.msra.mxu0 %v595
    %661 = vmatprep.subr.mxu0 %v598
    %662 = vmatpush1.msra.mxu0 %v597
    %663 = vmatprep.subr.mxu0 %v600
    %664 = vmatpush1.msra.mxu0 %v599
    %665 = vmatprep.subr.mxu0 %v602
    %666 = vmatpush1.msra.mxu0 %v601
    %667 = vmatprep.subr.mxu0 %v604
    %668 = vmatpush1.msra.mxu0 %v603
    %669 = vmatprep.subr.mxu0 %v606
    %670 = vmatpush1.msra.mxu0 %v605
    %671 = vmatprep.subr.mxu0 %v608
    %672 = vmatpush1.msra.mxu0 %v607
    %673 = vmatprep.mubr.f32.mxu0 %v543
    %674 = vmatmul.mubr.f32.gmra.mrb[0].mxu0 %v542
    %v675 = vpop.f32.mrb[0].mxu0
    %v676 = vadd.f32 0.0, %v675
    %v677 = vpop.f32.mrb[0].mxu0
    %v678 = vadd.f32 0.0, %v677
    %679 = vdwg.mxu0
    %v680 = vand.u32 %v117, 8
    %v681 = vand.u32 %v118, 8
    %vm682 = vcmp.ne.s32.totalorder %v680, 0
    %vm683 = vcmp.ne.s32.totalorder %v681, 0
    %v684 = vsel %vm682, %v676, %v542
    %v685 = vsel %vm683, %v678, %v543
    %v686 = vld [vmem:[%s4] sm:$0xff]
    %v687 = vld [vmem:[%s4 + $0x8] sm:$0xff]
    %v688 = vld [vmem:[%s4 + $0x10] sm:$0xff]
    %v689 = vld [vmem:[%s4 + $0x18] sm:$0xff]
    %v690 = vld [vmem:[%s4 + $0x20] sm:$0xff]
    %v691 = vld [vmem:[%s4 + $0x28] sm:$0xff]
    %v692 = vld [vmem:[%s4 + $0x30] sm:$0xff]
    %v693 = vld [vmem:[%s4 + $0x38] sm:$0xff]
    %v694 = vld [vmem:[%s4 + $0x40] sm:$0xff]
    %v695 = vld [vmem:[%s4 + $0x48] sm:$0xff]
    %v696 = vld [vmem:[%s4 + $0x50] sm:$0xff]
    %v697 = vld [vmem:[%s4 + $0x58] sm:$0xff]
    %v698 = vld [vmem:[%s4 + $0x60] sm:$0xff]
    %v699 = vld [vmem:[%s4 + $0x68] sm:$0xff]
    %v700 = vld [vmem:[%s4 + $0x70] sm:$0xff]
    %v701 = vld [vmem:[%s4 + $0x78] sm:$0xff]
    %v702 = vld [vmem:[%s4 + $0x80] sm:$0xff]
    %v703 = vld [vmem:[%s4 + $0x88] sm:$0xff]
    %v704 = vld [vmem:[%s4 + $0x90] sm:$0xff]
    %v705 = vld [vmem:[%s4 + $0x98] sm:$0xff]
    %v706 = vld [vmem:[%s4 + $0xa0] sm:$0xff]
    %v707 = vld [vmem:[%s4 + $0xa8] sm:$0xff]
    %v708 = vld [vmem:[%s4 + $0xb0] sm:$0xff]
    %v709 = vld [vmem:[%s4 + $0xb8] sm:$0xff]
    %v710 = vld [vmem:[%s4 + $0xc0] sm:$0xff]
    %v711 = vld [vmem:[%s4 + $0xc8] sm:$0xff]
    %v712 = vld [vmem:[%s4 + $0xd0] sm:$0xff]
    %v713 = vld [vmem:[%s4 + $0xd8] sm:$0xff]
    %v714 = vld [vmem:[%s4 + $0xe0] sm:$0xff]
    %v715 = vld [vmem:[%s4 + $0xe8] sm:$0xff]
    %v716 = vld [vmem:[%s4 + $0xf0] sm:$0xff]
    %v717 = vld [vmem:[%s4 + $0xf8] sm:$0xff]
    %718 = vmatprep.subr.mxu0 0.0
    %719 = vmatpush1.msra.mxu0 %v686
    %720 = vmatprep.subr.mxu0 0.0
    %721 = vmatpush1.msra.mxu0 %v687
    %722 = vmatprep.subr.mxu0 0.0
    %723 = vmatpush1.msra.mxu0 %v688
    %724 = vmatprep.subr.mxu0 0.0
    %725 = vmatpush1.msra.mxu0 %v689
    %726 = vmatprep.subr.mxu0 0.0
    %727 = vmatpush1.msra.mxu0 %v690
    %728 = vmatprep.subr.mxu0 0.0
    %729 = vmatpush1.msra.mxu0 %v691
    %730 = vmatprep.subr.mxu0 0.0
    %731 = vmatpush1.msra.mxu0 %v692
    %732 = vmatprep.subr.mxu0 0.0
    %733 = vmatpush1.msra.mxu0 %v693
    %734 = vmatprep.subr.mxu0 0.0
    %735 = vmatpush1.msra.mxu0 %v694
    %736 = vmatprep.subr.mxu0 0.0
    %737 = vmatpush1.msra.mxu0 %v695
    %738 = vmatprep.subr.mxu0 0.0
    %739 = vmatpush1.msra.mxu0 %v696
    %740 = vmatprep.subr.mxu0 0.0
    %741 = vmatpush1.msra.mxu0 %v697
    %742 = vmatprep.subr.mxu0 0.0
    %743 = vmatpush1.msra.mxu0 %v698
    %744 = vmatprep.subr.mxu0 0.0
    %745 = vmatpush1.msra.mxu0 %v699
    %746 = vmatprep.subr.mxu0 0.0
    %747 = vmatpush1.msra.mxu0 %v700
    %748 = vmatprep.subr.mxu0 0.0
    %749 = vmatpush1.msra.mxu0 %v701
    %750 = vmatprep.subr.mxu0 0.0
    %751 = vmatpush1.msra.mxu0 %v702
    %752 = vmatprep.subr.mxu0 0.0
    %753 = vmatpush1.msra.mxu0 %v703
    %754 = vmatprep.subr.mxu0 0.0
    %755 = vmatpush1.msra.mxu0 %v704
    %756 = vmatprep.subr.mxu0 0.0
    %757 = vmatpush1.msra.mxu0 %v705
    %758 = vmatprep.subr.mxu0 0.0
    %759 = vmatpush1.msra.mxu0 %v706
    %760 = vmatprep.subr.mxu0 0.0
    %761 = vmatpush1.msra.mxu0 %v707
    %762 = vmatprep.subr.mxu0 0.0
    %763 = vmatpush1.msra.mxu0 %v708
    %764 = vmatprep.subr.mxu0 0.0
    %765 = vmatpush1.msra.mxu0 %v709
    %766 = vmatprep.subr.mxu0 0.0
    %767 = vmatpush1.msra.mxu0 %v710
    %768 = vmatprep.subr.mxu0 0.0
    %769 = vmatpush1.msra.mxu0 %v711
    %770 = vmatprep.subr.mxu0 0.0
    %771 = vmatpush1.msra.mxu0 %v712
    %772 = vmatprep.subr.mxu0 0.0
    %773 = vmatpush1.msra.mxu0 %v713
    %774 = vmatprep.subr.mxu0 0.0
    %775 = vmatpush1.msra.mxu0 %v714
    %776 = vmatprep.subr.mxu0 0.0
    %777 = vmatpush1.msra.mxu0 %v715
    %778 = vmatprep.subr.mxu0 0.0
    %779 = vmatpush1.msra.mxu0 %v716
    %780 = vmatprep.subr.mxu0 0.0
    %781 = vmatpush1.msra.mxu0 %v717
    %782 = vmatprep.mubr.f32.mxu0 %v685
    %783 = vmatmul.mubr.f32.gmra.mrb[0].mxu0 %v684
    %v784 = vpop.f32.mrb[0].mxu0
    %v785 = vadd.f32 0.0, %v784
    %v786 = vpop.f32.mrb[0].mxu0
    %787 = vdwg.mxu0
    %788 = vst.msk [vmem:[#allocation5] sm:$0xff] %vm42, %v785
    // Predicated region
    $region26: #{tpu_custom_call.1} parent=1 // pred_check
      _
    $region27: #{tpu_custom_call.1} parent=1 // pred_check_branch
      %790 = sbr.rel (0) target = $region29
    $region28: #{tpu_custom_call.1} parent=1 // pred_region
      %s792 = ssub.s32 128, 128
      %793 = vsyncadd [#allocation4], %s792
      %s795 = sshll.u32 [#allocation5], 4
      %s796 = int_to_ptr.vmem [resolvable:$true] %s795
      %798 = dma.vmem_to_hbm [thread:$0]  %s796, 128, %s5, [#allocation4]
    $region29: #{tpu_custom_call.1} parent=1 // pred_fallthru
      _
    // Predicated region
    $region30: #{tpu_custom_call.1} parent=1 // pred_check
      _
    $region31: #{tpu_custom_call.1} parent=1 // pred_check_branch
      %800 = sbr.rel (0) target = $region33
    $region32: #{tpu_custom_call.1} parent=1 // pred_region
      %801 = dma.done [#allocation4], 128
    $region33: #{tpu_custom_call.1} parent=1 // pred_fallthru
      _
    %802 = vsyncpa [#allocation3], 1
    %803 = vsyncpa [#allocation4], 1

</llo_original>
